<compile_context>
chip_gen: v7x
topology: tpu7x:2x2x1
jax: 0.10.0
libtpu: 0.0.40
codegen_flags: <defaults>
</compile_context>

<pallas_src>
import jax
import jax.numpy as jnp
from jax.experimental import pallas as pl
from jax.experimental.pallas import tpu as pltpu


def _cosine_kernel(x_ref, y_ref, o_ref, inv_xn_ref):
    # x_ref: (1, TN, D), y_ref: (1, TM, D), o_ref: (1, TN, TM)
    # inv_xn_ref: (TN, 1) f32 scratch, persistent across the M-tile axis.
    j = pl.program_id(2)

    x = x_ref[0].astype(jnp.float32)          # (TN, D)
    y = y_ref[0].astype(jnp.float32)          # (TM, D)

    # Hoist the x-row reciprocal norms: compute once per (b, i) at j == 0 and
    # reuse for all M tiles of this N tile.
    @pl.when(j == 0)
    def _():
        ssx = jnp.sum(x * x, axis=-1, keepdims=True)          # (TN, 1)
        # min(rsqrt(ss), 1e8)  ==  1 / clamp(sqrt(ss), min=1e-8); zero rows
        # give 1e8 (finite), matching the PyTorch clamp-then-divide behavior.
        inv_xn_ref[...] = jnp.minimum(jax.lax.rsqrt(ssx), 1e8)

    # y-row reciprocal norms (cheap O(TM*D) work, hides under the matmul).
    ssy = jnp.sum(y * y, axis=-1, keepdims=True)               # (TM, 1)
    inv_yn = jnp.minimum(jax.lax.rsqrt(ssy), 1e8)              # (TM, 1)

    # Bake the column normalization into the RHS (lane-broadcast multiply),
    # so no sublane->lane transpose of the y norms is ever needed.
    y_scaled = y * inv_yn                                      # (TM, D)

    # MXU: (TN, D) x (TM, D)^T -> (TN, TM), f32 accumulation.
    num = jax.lax.dot_general(
        x, y_scaled,
        dimension_numbers=(((1,), (1,)), ((), ())),
        preferred_element_type=jnp.float32,
    )

    # Row normalization: one VPU multiply per element (no divide).
    o_ref[0] = (num * inv_xn_ref[...]).astype(o_ref.dtype)


def _round_up(a, b):
    return (a + b - 1) // b * b


def pairwise_weighted_cosine_similarity(x, y, *, tn=None, tm=None):
    """x: (B, N, D), y: (B, M, D) -> (B, N, M) cosine similarity."""
    B, N, D = x.shape
    B2, M, D2 = y.shape
    assert B == B2 and D == D2

    out_dtype = x.dtype

    # Tile sizes: TN multiple of 8 (sublanes), TM multiple of 128 (lane-dense
    # output stores).  Small shapes use a single padded tile.
    TN = tn if tn is not None else min(256, _round_up(N, 8))
    TM = tm if tm is not None else min(256, _round_up(M, 128))

    n_pad = _round_up(N, TN)
    m_pad = _round_up(M, TM)
    if n_pad != N:
        x = jnp.pad(x, ((0, 0), (0, n_pad - N), (0, 0)))
    if m_pad != M:
        y = jnp.pad(y, ((0, 0), (0, m_pad - M), (0, 0)))
    # Padded rows are all-zero -> inv norm clamps to 1e8 -> outputs are 0 in
    # the padded region, which is sliced away below.

    grid = (B, n_pad // TN, m_pad // TM)

    itemsize = jnp.dtype(x.dtype).itemsize
    # double-buffered inputs + double-buffered output tile + scratch
    est_vmem = (2 * (TN * D + TM * D) * itemsize
                + 2 * TN * TM * jnp.dtype(out_dtype).itemsize
                + TN * 4)
    vmem_limit = int(min(max(3 * est_vmem, 32 * 1024 * 1024),
                         64 * 1024 * 1024))

    out = pl.pallas_call(
        _cosine_kernel,
        out_shape=jax.ShapeDtypeStruct((B, n_pad, m_pad), out_dtype),
        grid_spec=pltpu.PrefetchScalarGridSpec(
            num_scalar_prefetch=0,
            grid=grid,
            in_specs=[
                pl.BlockSpec((1, TN, D), lambda b, i, j: (b, i, 0)),
                pl.BlockSpec((1, TM, D), lambda b, i, j: (b, j, 0)),
            ],
            out_specs=pl.BlockSpec((1, TN, TM), lambda b, i, j: (b, i, j)),
            scratch_shapes=[pltpu.VMEM((TN, 1), jnp.float32)],
        ),
        compiler_params=pltpu.CompilerParams(
            # M-tile axis is "arbitrary" because inv_xn scratch is initialized
            # at j == 0 and reused across j; B and N-tiles feed the megacore.
            dimension_semantics=("parallel", "parallel", "arbitrary"),
            vmem_limit_bytes=vmem_limit,
        ),
    )(x, y)

    if n_pad != N or m_pad != M:
        out = out[:, :N, :M]
    return out


def reference(x, y):
    num = jnp.einsum("bnd,bmd->bnm", x, y)
    xn = jnp.maximum(jnp.linalg.norm(x, axis=2), 1e-8)
    yn = jnp.maximum(jnp.linalg.norm(y, axis=2), 1e-8)
    return num / (xn[:, :, None] * yn[:, None, :])


if __name__ == "__main__":
    key = jax.random.PRNGKey(0)
    k1, k2 = jax.random.split(key)

    B, N, M, D = 2, 8, 8, 32
    x = jax.random.normal(k1, (B, N, D), dtype=jnp.float32)
    y = jax.random.normal(k2, (B, M, D), dtype=jnp.float32)

    # Parameter from __init__ (unused in forward), deterministic init:
    w = jnp.ones((1, 1, D), dtype=jnp.float32)  # noqa: F841

    out = pairwise_weighted_cosine_similarity(x, y)
    jax.block_until_ready(out)

    ref = reference(x, y)
    assert out.shape == (B, N, M)
    assert jnp.allclose(out, ref, atol=1e-5, rtol=1e-5)
    print("KERNEL_OK")
</pallas_src>

<mosaic_0001>
module attributes {stable_mosaic.version = 11 : i64} {
  func.func @_cosine_kernel(%arg0: i32, %arg1: i32, %arg2: i32, %arg3: memref<1x8x32xf32, #tpu.memory_space<vmem>>, %arg4: memref<1x128x32xf32, #tpu.memory_space<vmem>>, %arg5: memref<1x8x128xf32, #tpu.memory_space<vmem>>, %arg6: memref<8x1xf32, #tpu.memory_space<vmem>>) attributes {dimension_semantics = [#tpu.dimension_semantics<parallel>, #tpu.dimension_semantics<parallel>, #tpu.dimension_semantics<arbitrary>], iteration_bounds = array<i64: 2, 1, 1>, scalar_prefetch = 0 : i64, scratch_operands = 1 : i64, tpu.core_type = #tpu.core_type<tc>, window_params = [{transform_indices = @transform_0, window_bounds = array<i64: 1, 8, 32>}, {transform_indices = @transform_1, window_bounds = array<i64: 1, 128, 32>}, {transform_indices = @transform_2, window_bounds = array<i64: 1, 8, 128>}]} {
    %c0 = arith.constant 0 : index
    %c0_0 = arith.constant 0 : index
    %c0_1 = arith.constant 0 : index
    %0 = vector.load %arg3[%c0, %c0_0, %c0_1] : memref<1x8x32xf32, #tpu.memory_space<vmem>>, vector<1x8x32xf32>
    %1 = vector.shape_cast %0 : vector<1x8x32xf32> to vector<8x32xf32>
    %c0_2 = arith.constant 0 : index
    %c0_3 = arith.constant 0 : index
    %c0_4 = arith.constant 0 : index
    %2 = vector.load %arg4[%c0_2, %c0_3, %c0_4] : memref<1x128x32xf32, #tpu.memory_space<vmem>>, vector<1x128x32xf32>
    %3 = vector.shape_cast %2 : vector<1x128x32xf32> to vector<128x32xf32>
    %c0_i32 = arith.constant 0 : i32
    %4 = arith.cmpi eq, %arg2, %c0_i32 : i32
    %5 = arith.extui %4 : i1 to i32
    %c0_i32_5 = arith.constant 0 : i32
    %6 = arith.cmpi ne, %5, %c0_i32_5 : i32
    scf.if %6 {
      %22 = arith.mulf %1, %1 : vector<8x32xf32>
      %cst_13 = arith.constant dense<0.000000e+00> : vector<8xf32>
      %23 = vector.multi_reduction <add>, %22, %cst_13 [1] : vector<8x32xf32> to vector<8xf32>
      %24 = vector.shape_cast %23 : vector<8xf32> to vector<8x1xf32>
      %25 = math.rsqrt %24 : vector<8x1xf32>
      %cst_14 = arith.constant 1.000000e+08 : f32
      %26 = vector.broadcast %cst_14 : f32 to vector<8x1xf32>
      %27 = arith.minimumf %25, %26 : vector<8x1xf32>
      %c0_15 = arith.constant 0 : index
      %c0_16 = arith.constant 0 : index
      %28 = vector.load %arg6[%c0_15, %c0_16] : memref<8x1xf32, #tpu.memory_space<vmem>>, vector<8x1xf32>
      tpu.vector_store %arg6[%c0_15, %c0_16], %27 {strides = array<i32>} : memref<8x1xf32, #tpu.memory_space<vmem>>, vector<8x1xf32>,
    } else {
    }
    %7 = arith.mulf %3, %3 : vector<128x32xf32>
    %cst = arith.constant dense<0.000000e+00> : vector<128xf32>
    %8 = vector.multi_reduction <add>, %7, %cst [1] : vector<128x32xf32> to vector<128xf32>
    %9 = vector.shape_cast %8 : vector<128xf32> to vector<128x1xf32>
    %10 = math.rsqrt %9 : vector<128x1xf32>
    %cst_6 = arith.constant 1.000000e+08 : f32
    %11 = vector.broadcast %cst_6 : f32 to vector<128x1xf32>
    %12 = arith.minimumf %10, %11 : vector<128x1xf32>
    %13 = vector.broadcast %12 : vector<128x1xf32> to vector<128x32xf32>
    %14 = arith.mulf %3, %13 : vector<128x32xf32>
    %cst_7 = arith.constant dense<0.000000e+00> : vector<8x128xf32>
    %15 = tpu.matmul %1, %14, %cst_7 {dimension_numbers = #tpu.dot_dimension_numbers<[1], [1], [0], [0], [0, 0, 1, 0], [], []>} : vector<8x32xf32>, vector<128x32xf32>, vector<8x128xf32> -> vector<8x128xf32>
    %c0_8 = arith.constant 0 : index
    %c0_9 = arith.constant 0 : index
    %16 = vector.load %arg6[%c0_8, %c0_9] : memref<8x1xf32, #tpu.memory_space<vmem>>, vector<8x1xf32>
    %17 = vector.broadcast %16 : vector<8x1xf32> to vector<8x128xf32>
    %18 = arith.mulf %15, %17 : vector<8x128xf32>
    %c0_10 = arith.constant 0 : index
    %c0_11 = arith.constant 0 : index
    %c0_12 = arith.constant 0 : index
    %19 = vector.load %arg5[%c0_10, %c0_11, %c0_12] : memref<1x8x128xf32, #tpu.memory_space<vmem>>, vector<1x8x128xf32>
    %20 = vector.shape_cast %19 : vector<1x8x128xf32> to vector<8x128xf32>
    %21 = vector.shape_cast %18 : vector<8x128xf32> to vector<1x8x128xf32>
    tpu.vector_store %arg5[%c0_10, %c0_11, %c0_12], %21 {strides = array<i32>} : memref<1x8x128xf32, #tpu.memory_space<vmem>>, vector<1x8x128xf32>,
    return
  }
  func.func @transform_0(%arg0: i32, %arg1: i32, %arg2: i32) -> (i32, i32, i32) {
    %c0_i32 = arith.constant 0 : i32
    %c0_i32_0 = arith.constant 0 : i32
    return %arg0, %arg1, %c0_i32 : i32, i32, i32
  }
  func.func @transform_1(%arg0: i32, %arg1: i32, %arg2: i32) -> (i32, i32, i32) {
    %c0_i32 = arith.constant 0 : i32
    %c0_i32_0 = arith.constant 0 : i32
    return %arg0, %arg2, %c0_i32 : i32, i32, i32
  }
  func.func @transform_2(%arg0: i32, %arg1: i32, %arg2: i32) -> (i32, i32, i32) {
    %c0_i32 = arith.constant 0 : i32
    return %arg0, %arg1, %arg2 : i32, i32, i32
  }
}

</mosaic_0001>

<llo_original>
// kernel: tpu_custom_call.1
$region0: #{tpu_custom_call.1}
  #allocation0 [shape = 'u32[]', space=smem, size = 0x4, offset = 0x4, fixed_abs, tag = 'smem constant byte address 0x4 - core index']
  #allocation1 [shape = 'u32[144,128]{1,0:T(1,128)}', space=vmem, size = 0x12000, scoped, tag = 'internal scratch']
  #allocation2 [shape = 'f32[8,1]{1,0:T(8,128)}', space=vmem, size = 0x1000, scoped, tag = 'scratch operand']
  %s0 = inlined_call_operand.vmem [shape: f32[2,8,32], index: 0, kind: input, shape index: {}]
  %s1 = inlined_call_operand.vmem [shape: f32[2,128,32], index: 1, kind: input, shape index: {}]
  %s2 = inlined_call_operand.hbm [shape: f32[2,8,128], index: 2, kind: output, shape index: {}]
  %s3 = sld [smem:[#allocation0]]
  $region45: #{tpu_custom_call.1} parent=0
    _
  %s5 = ssub.s32 1, %s3
  %s6 = scalar_select 0, %s5, %s3
  $region1: #{tpu_custom_call.1} parent=0
    #allocation3 [shape = 'u8[8192]{0}', space=vmem, size = 0x2000, scoped, tag = 'output window, operand 0']
    #allocation4 [shape = 's32[2]{0}', space=sflag, size = 0x8, scoped, tag = 'scoped memory for tpu_custom_call.1']
    %7 = vsyncpa [#allocation4], 0
    %s8 = scalar_lea.sflag [#allocation4], 1
    %9 = vsyncpa %s8, 0
    loop: start=0, step=1, limit=4
    $region2: #{tpu_custom_call.1} parent=1 // loop_pre_header
      _
    $region3: #{tpu_custom_call.1} parent=1 // loop_header
      %s11 = sphi 0, %s15
      %p12 = scmp.ge.s32.totalorder %s11, 4
      %s18 = sphi 0, %s37
      %s19 = sphi 0, %s33
      %s20 = sphi 0, %s29
      %s21 = sphi 0, %s18
      %s22 = sphi 0, %s19
      %s23 = sphi 0, %s20
      %s24 = sphi 0, %s21
      %s25 = sphi 0, %s22
      %s26 = sphi 0, %s23
      %s42 = sphi 0, %s44
      %s45 = sphi 0, %s42
      %s46 = sphi 0, %s45
      %s62 = sphi 0, %s46
      %s70 = sphi 0, %s72
      %s73 = sphi 0, %s70
      %s74 = sphi 0, %s73
      %s90 = sphi 0, %s74
      %s100 = sphi 0, %s102
      %s103 = sphi 0, %s100
      %s104 = sphi 0, %s103
      %s120 = sphi 0, %s104
    $region4: #{tpu_custom_call.1} parent=1 // loop_header_branch
      %14 = sbr.rel (%p12) target = $region8
    $region5: #{tpu_custom_call.1} parent=1 // loop_body
      %s16 = ssub.s32 %s11, 1
      %s17 = ssub.s32 %s11, 2
      %s27 = sadd.s32 1, %s20
      %p28 = scmp.ge.s32.totalorder %s27, 1
      %s29 = scalar_select %p28, 0, %s27
      %s30 = sadd.s32 1, %s19
      %s31 = scalar_select %p28, %s30, %s19
      %p32 = scmp.ge.s32.totalorder %s31, 1
      %s33 = scalar_select %p32, 0, %s31
      %s34 = sadd.s32 1, %s18
      %s35 = scalar_select %p32, %s34, %s18
      %p36 = scmp.ge.s32.totalorder %s35, 2
      %s37 = scalar_select %p36, 0, %s35
      %s38 = ssub.s32 %s18, %s37
      %s39 = ssub.s32 %s19, %s33
      %s40 = sor.u32 %s38, %s39
      %p41 = scmp.eq.s32.totalorder %s40, 0
      %s43 = sadd.s32 %s42, 1
      %s44 = scalar_select %p41, %s42, %s43
      %p47 = pneg %p41
      %p48 = scmp.eq.s32.totalorder %s11, 1
      %p49 = por %p47, %p48
      %p50 = scmp.ne.s32.totalorder %s42, %s45
      %p51 = scmp.eq.s32.totalorder %s11, 0
      %p52 = por %p50, %p51
      %p53 = scmp.ne.s32.totalorder %s42, %s45
      %p54 = scmp.eq.s32.totalorder %s16, 1
      %p55 = por %p53, %p54
      %p56 = scmp.ne.s32.totalorder %s45, %s46
      %p57 = scmp.eq.s32.totalorder %s16, 0
      %p58 = por %p56, %p57
      %p59 = scmp.ne.s32.totalorder %s45, %s46
      %p60 = scmp.eq.s32.totalorder %s17, 1
      %p61 = por %p59, %p60
      %p63 = scmp.ne.s32.totalorder %s46, %s62
      %p64 = scmp.eq.s32.totalorder %s17, 0
      %p65 = por %p63, %p64
      %s66 = ssub.s32 %s18, %s37
      %s67 = ssub.s32 %s20, %s29
      %s68 = sor.u32 %s66, %s67
      %p69 = scmp.eq.s32.totalorder %s68, 0
      %s71 = sadd.s32 %s70, 1
      %s72 = scalar_select %p69, %s70, %s71
      %p75 = pneg %p69
      %p76 = scmp.eq.s32.totalorder %s11, 1
      %p77 = por %p75, %p76
      %p78 = scmp.ne.s32.totalorder %s70, %s73
      %p79 = scmp.eq.s32.totalorder %s11, 0
      %p80 = por %p78, %p79
      %p81 = scmp.ne.s32.totalorder %s70, %s73
      %p82 = scmp.eq.s32.totalorder %s16, 1
      %p83 = por %p81, %p82
      %p84 = scmp.ne.s32.totalorder %s73, %s74
      %p85 = scmp.eq.s32.totalorder %s16, 0
      %p86 = por %p84, %p85
      %p87 = scmp.ne.s32.totalorder %s73, %s74
      %p88 = scmp.eq.s32.totalorder %s17, 1
      %p89 = por %p87, %p88
      %p91 = scmp.ne.s32.totalorder %s74, %s90
      %p92 = scmp.eq.s32.totalorder %s17, 0
      %p93 = por %p91, %p92
      %s94 = ssub.s32 %s18, %s37
      %s95 = ssub.s32 %s19, %s33
      %s96 = sor.u32 %s94, %s95
      %s97 = ssub.s32 %s20, %s29
      %s98 = sor.u32 %s96, %s97
      %p99 = scmp.eq.s32.totalorder %s98, 0
      %s101 = sadd.s32 %s100, 1
      %s102 = scalar_select %p99, %s100, %s101
      %p105 = pneg %p99
      %p106 = scmp.eq.s32.totalorder %s11, 1
      %p107 = por %p105, %p106
      %p108 = scmp.ne.s32.totalorder %s100, %s103
      %p109 = scmp.eq.s32.totalorder %s11, 0
      %p110 = por %p108, %p109
      %p111 = scmp.ne.s32.totalorder %s100, %s103
      %p112 = scmp.eq.s32.totalorder %s16, 1
      %p113 = por %p111, %p112
      %p114 = scmp.ne.s32.totalorder %s103, %s104
      %p115 = scmp.eq.s32.totalorder %s16, 0
      %p116 = por %p114, %p115
      %p117 = scmp.ne.s32.totalorder %s103, %s104
      %p118 = scmp.eq.s32.totalorder %s17, 1
      %p119 = por %p117, %p118
      %p121 = scmp.ne.s32.totalorder %s104, %s120
      %p122 = scmp.eq.s32.totalorder %s17, 0
      %p123 = por %p121, %p122
      %p124 = scmp.le.s32.totalorder 1, %s11
      %p125 = scmp.lt.s32.totalorder %s11, 3
      %p126 = pnand %p124, %p125
      %p127 = pneg %p126
      // Predicated region
      $region9: #{tpu_custom_call.1} parent=5 // pred_check
        _
      $region10: #{tpu_custom_call.1} parent=5 // pred_check_branch
        %129 = sbr.rel (%p126) target = $region12
      $region11: #{tpu_custom_call.1} parent=5 // pred_region
        %s130 = ssub.s32 %s11, 1
      $region12: #{tpu_custom_call.1} parent=5 // pred_fallthru
        _
      %p131 = scmp.lt.s32.totalorder %s11, 2
      // Predicated region
      $region13: #{tpu_custom_call.1} parent=5 // pred_check
        %p132 = pneg %p131
      $region14: #{tpu_custom_call.1} parent=5 // pred_check_branch
        %134 = sbr.rel (%p132) target = $region16
      $region15: #{tpu_custom_call.1} parent=5 // pred_region
        // Predicated region
        $region17: #{tpu_custom_call.1} parent=15 // pred_check
          %p135 = pneg %p52
        $region18: #{tpu_custom_call.1} parent=15 // pred_check_branch
          %137 = sbr.rel (%p135) target = $region20
        $region19: #{tpu_custom_call.1} parent=15 // pred_region
          %p138 = scmp.lt.s32.totalorder %s18, 1
          %s139 = scalar_select %p138, %s18, 1
          %p140 = scmp.lt.s32.totalorder %s19, 0
          %s141 = scalar_select %p140, %s19, 0
          %s142 = sadd.s32 %s141, %s139
          %s143 = smul.addr %s142, 8
          %s144 = scalar_lea.vmem %s0, %s143
        $region20: #{tpu_custom_call.1} parent=15 // pred_fallthru
          _
        // Predicated region
        $region21: #{tpu_custom_call.1} parent=15 // pred_check
          %p145 = pneg %p80
        $region22: #{tpu_custom_call.1} parent=15 // pred_check_branch
          %147 = sbr.rel (%p145) target = $region24
        $region23: #{tpu_custom_call.1} parent=15 // pred_region
          %s148 = smul.u32 16, %s20
          %p149 = scmp.lt.s32.totalorder %s18, 1
          %s150 = scalar_select %p149, %s18, 1
          %p151 = scmp.lt.s32.totalorder %s148, 15
          %s152 = scalar_select %p151, %s148, 15
          %s153 = smul.addr %s150, 16
          %s154 = sadd.s32 %s152, %s153
          %s155 = smul.addr %s154, 8
          %s156 = scalar_lea.vmem %s1, %s155
          %s157 = smul.u32 16, %s20
        $region24: #{tpu_custom_call.1} parent=15 // pred_fallthru
          _
      $region16: #{tpu_custom_call.1} parent=5 // pred_fallthru
        _
      %p158 = scmp.le.s32.totalorder 1, %s11
      %p159 = scmp.lt.s32.totalorder %s11, 3
      %p160 = pnand %p158, %p159
      %p161 = pneg %p160
      // Predicated region
      $region25: #{tpu_custom_call.1} parent=5 // pred_check
        _
      $region26: #{tpu_custom_call.1} parent=5 // pred_check_branch
        %163 = sbr.rel (%p160) target = $region28
      $region27: #{tpu_custom_call.1} parent=5 // pred_region
        %s164 = ssub.s32 %s11, 1
        %p165 = scmp.lt.s32.totalorder %s21, 1
        %s166 = scalar_select %p165, %s21, 1
        %p167 = scmp.lt.s32.totalorder %s22, 0
        %s168 = scalar_select %p167, %s22, 0
        %s169 = sadd.s32 %s168, %s166
        %s170 = smul.addr %s169, 8
        %s171 = scalar_lea.vmem %s0, %s170
        %p172 = pneg %p58
        %p173 = pneg %p55
        %s174 = smul.u32 16, %s23
        %p175 = scmp.lt.s32.totalorder %s21, 1
        %s176 = scalar_select %p175, %s21, 1
        %p177 = scmp.lt.s32.totalorder %s174, 15
        %s178 = scalar_select %p177, %s174, 15
        %s179 = smul.addr %s176, 16
        %s180 = sadd.s32 %s178, %s179
        %s181 = smul.addr %s180, 8
        %s182 = scalar_lea.vmem %s1, %s181
        %p183 = pneg %p86
        %p184 = pneg %p83
        %p185 = pneg %p116
        %p186 = pneg %p113
        %s187 = sand.u32 %s103, 1
        %s188 = scalar_lea.sflag [#allocation4], %s187
        %s189 = sand.u32 %s103, 1
        %s190 = smul.addr %s189, 8
        %s191 = scalar_lea.vmem [#allocation3], %s190
        %p192 = scmp.lt.s32.totalorder %s21, 1
        %s193 = scalar_select %p192, %s21, 1
        %p194 = scmp.lt.s32.totalorder %s22, 0
        %s195 = scalar_select %p194, %s22, 0
        %s196 = sadd.s32 %s195, %s193
        %s197 = smul.addr %s196, 8
        %s198 = scalar_lea.vmem %s0, %s197
        %s199 = smul.u32 16, %s23
        %p200 = scmp.lt.s32.totalorder %s21, 1
        %s201 = scalar_select %p200, %s21, 1
        %p202 = scmp.lt.s32.totalorder %s199, 15
        %s203 = scalar_select %p202, %s199, 15
        %s204 = smul.addr %s201, 16
        %s205 = sadd.s32 %s203, %s204
        %s206 = smul.addr %s205, 8
        %s207 = scalar_lea.vmem %s1, %s206
        %s208 = smul.u32 16, %s23
        %v209 = vld [vmem:[%s198] sm:$0xff]
        %v210 = vld [vmem:[%s207] sm:$0xff]
        %v211 = vld [vmem:[%s207 + $0x8] sm:$0xff]
        %v212 = vld [vmem:[%s207 + $0x10] sm:$0xff]
        %v213 = vld [vmem:[%s207 + $0x18] sm:$0xff]
        %v214 = vld [vmem:[%s207 + $0x20] sm:$0xff]
        %v215 = vld [vmem:[%s207 + $0x28] sm:$0xff]
        %v216 = vld [vmem:[%s207 + $0x30] sm:$0xff]
        %v217 = vld [vmem:[%s207 + $0x38] sm:$0xff]
        %v218 = vld [vmem:[%s207 + $0x40] sm:$0xff]
        %v219 = vld [vmem:[%s207 + $0x48] sm:$0xff]
        %v220 = vld [vmem:[%s207 + $0x50] sm:$0xff]
        %v221 = vld [vmem:[%s207 + $0x58] sm:$0xff]
        %v222 = vld [vmem:[%s207 + $0x60] sm:$0xff]
        %v223 = vld [vmem:[%s207 + $0x68] sm:$0xff]
        %v224 = vld [vmem:[%s207 + $0x70] sm:$0xff]
        %v225 = vld [vmem:[%s207 + $0x78] sm:$0xff]
        %p226 = scmp.eq.s32.totalorder %s23, 0
        // Predicated region
        $region29: #{tpu_custom_call.1} parent=27 // pred_check
          %p227 = pneg %p226
        $region30: #{tpu_custom_call.1} parent=27 // pred_check_branch
          %229 = sbr.rel (%p227) target = $region32
        $region31: #{tpu_custom_call.1} parent=27 // pred_region
          %v230 = vmul.f32 %v209, %v209
          %vm231 = vcmask 261120
          %v232 = vsel %vm231, %v230, 0.0
          %233 = vadd.xlane.f32.xlu0 %v232
          %v234 = vpop.xlane.xlu0 %233
          %v235 = vrsqrt.pop %v234
          %v236 = vmin.f32 %v235, 1e+08
          %vm237 = vcmask 7168
          %238 = vst.msk [vmem:[#allocation2] sm:$0xff] %vm237, %v236
        $region32: #{tpu_custom_call.1} parent=27 // pred_fallthru
          _
        %v239 = vmul.f32 %v210, %v210
        %v240 = vmul.f32 %v211, %v211
        %v241 = vmul.f32 %v212, %v212
        %v242 = vmul.f32 %v213, %v213
        %v243 = vmul.f32 %v214, %v214
        %v244 = vmul.f32 %v215, %v215
        %v245 = vmul.f32 %v216, %v216
        %v246 = vmul.f32 %v217, %v217
        %v247 = vmul.f32 %v218, %v218
        %v248 = vmul.f32 %v219, %v219
        %v249 = vmul.f32 %v220, %v220
        %v250 = vmul.f32 %v221, %v221
        %v251 = vmul.f32 %v222, %v222
        %v252 = vmul.f32 %v223, %v223
        %v253 = vmul.f32 %v224, %v224
        %v254 = vmul.f32 %v225, %v225
        %vm255 = vcmask 261120
        %v256 = vsel %vm255, %v239, 0.0
        %257 = vadd.xlane.f32.xlu0 %v256
        %v258 = vpop.xlane.xlu0 %257
        %v259 = vsel %vm255, %v240, 0.0
        %260 = vadd.xlane.f32.xlu0 %v259
        %v261 = vpop.xlane.xlu0 %260
        %v262 = vsel %vm255, %v241, 0.0
        %263 = vadd.xlane.f32.xlu0 %v262
        %v264 = vpop.xlane.xlu0 %263
        %v265 = vsel %vm255, %v242, 0.0
        %266 = vadd.xlane.f32.xlu0 %v265
        %v267 = vpop.xlane.xlu0 %266
        %v268 = vsel %vm255, %v243, 0.0
        %269 = vadd.xlane.f32.xlu0 %v268
        %v270 = vpop.xlane.xlu0 %269
        %v271 = vsel %vm255, %v244, 0.0
        %272 = vadd.xlane.f32.xlu0 %v271
        %v273 = vpop.xlane.xlu0 %272
        %v274 = vsel %vm255, %v245, 0.0
        %275 = vadd.xlane.f32.xlu0 %v274
        %v276 = vpop.xlane.xlu0 %275
        %v277 = vsel %vm255, %v246, 0.0
        %278 = vadd.xlane.f32.xlu0 %v277
        %v279 = vpop.xlane.xlu0 %278
        %v280 = vsel %vm255, %v247, 0.0
        %281 = vadd.xlane.f32.xlu0 %v280
        %v282 = vpop.xlane.xlu0 %281
        %v283 = vsel %vm255, %v248, 0.0
        %284 = vadd.xlane.f32.xlu0 %v283
        %v285 = vpop.xlane.xlu0 %284
        %v286 = vsel %vm255, %v249, 0.0
        %287 = vadd.xlane.f32.xlu0 %v286
        %v288 = vpop.xlane.xlu0 %287
        %v289 = vsel %vm255, %v250, 0.0
        %290 = vadd.xlane.f32.xlu0 %v289
        %v291 = vpop.xlane.xlu0 %290
        %v292 = vsel %vm255, %v251, 0.0
        %293 = vadd.xlane.f32.xlu0 %v292
        %v294 = vpop.xlane.xlu0 %293
        %v295 = vsel %vm255, %v252, 0.0
        %296 = vadd.xlane.f32.xlu0 %v295
        %v297 = vpop.xlane.xlu0 %296
        %v298 = vsel %vm255, %v253, 0.0
        %299 = vadd.xlane.f32.xlu0 %v298
        %v300 = vpop.xlane.xlu0 %299
        %v301 = vsel %vm255, %v254, 0.0
        %302 = vadd.xlane.f32.xlu0 %v301
        %v303 = vpop.xlane.xlu0 %302
        %v304 = vrsqrt.pop %v258
        %v305 = vrsqrt.pop %v261
        %v306 = vrsqrt.pop %v264
        %v307 = vrsqrt.pop %v267
        %v308 = vrsqrt.pop %v270
        %v309 = vrsqrt.pop %v273
        %v310 = vrsqrt.pop %v276
        %v311 = vrsqrt.pop %v279
        %v312 = vrsqrt.pop %v282
        %v313 = vrsqrt.pop %v285
        %v314 = vrsqrt.pop %v288
        %v315 = vrsqrt.pop %v291
        %v316 = vrsqrt.pop %v294
        %v317 = vrsqrt.pop %v297
        %v318 = vrsqrt.pop %v300
        %v319 = vrsqrt.pop %v303
        %v320 = vmin.f32 %v304, 1e+08
        %v321 = vmin.f32 %v305, 1e+08
        %v322 = vmin.f32 %v306, 1e+08
        %v323 = vmin.f32 %v307, 1e+08
        %v324 = vmin.f32 %v308, 1e+08
        %v325 = vmin.f32 %v309, 1e+08
        %v326 = vmin.f32 %v310, 1e+08
        %v327 = vmin.f32 %v311, 1e+08
        %v328 = vmin.f32 %v312, 1e+08
        %v329 = vmin.f32 %v313, 1e+08
        %v330 = vmin.f32 %v314, 1e+08
        %v331 = vmin.f32 %v315, 1e+08
        %v332 = vmin.f32 %v316, 1e+08
        %v333 = vmin.f32 %v317, 1e+08
        %v334 = vmin.f32 %v318, 1e+08
        %v335 = vmin.f32 %v319, 1e+08
        %v336 = vmul.f32 %v210, %v320
        %v337 = vmul.f32 %v211, %v321
        %v338 = vmul.f32 %v212, %v322
        %v339 = vmul.f32 %v213, %v323
        %v340 = vmul.f32 %v214, %v324
        %v341 = vmul.f32 %v215, %v325
        %v342 = vmul.f32 %v216, %v326
        %v343 = vmul.f32 %v217, %v327
        %v344 = vmul.f32 %v218, %v328
        %v345 = vmul.f32 %v219, %v329
        %v346 = vmul.f32 %v220, %v330
        %v347 = vmul.f32 %v221, %v331
        %v348 = vmul.f32 %v222, %v332
        %v349 = vmul.f32 %v223, %v333
        %v350 = vmul.f32 %v224, %v334
        %v351 = vmul.f32 %v225, %v335
        %v353 = vsel %vm255, %v209, 0
        %v356 = vsel %vm255, %v336, 0
        %v359 = vsel %vm255, %v337, 0
        %v362 = vsel %vm255, %v338, 0
        %v365 = vsel %vm255, %v339, 0
        %v368 = vsel %vm255, %v340, 0
        %v371 = vsel %vm255, %v341, 0
        %v374 = vsel %vm255, %v342, 0
        %v377 = vsel %vm255, %v343, 0
        %v380 = vsel %vm255, %v344, 0
        %v383 = vsel %vm255, %v345, 0
        %v386 = vsel %vm255, %v346, 0
        %v389 = vsel %vm255, %v347, 0
        %v392 = vsel %vm255, %v348, 0
        %v395 = vsel %vm255, %v349, 0
        %v398 = vsel %vm255, %v350, 0
        %v401 = vsel %vm255, %v351, 0
        %403 = vmatprep.subr.mxu0 0.0
        %404 = vmatpush1.xpose.msra.mxu0 %v356
        %405 = vmatprep.subr.mxu0 0.0
        %406 = vmatpush1.xpose.msra.mxu0 %v359
        %407 = vmatprep.subr.mxu0 0.0
        %408 = vmatpush1.xpose.msra.mxu0 %v362
        %409 = vmatprep.subr.mxu0 0.0
        %410 = vmatpush1.xpose.msra.mxu0 %v365
        %411 = vmatprep.subr.mxu0 0.0
        %412 = vmatpush1.xpose.msra.mxu0 %v368
        %413 = vmatprep.subr.mxu0 0.0
        %414 = vmatpush1.xpose.msra.mxu0 %v371
        %415 = vmatprep.subr.mxu0 0.0
        %416 = vmatpush1.xpose.msra.mxu0 %v374
        %417 = vmatprep.subr.mxu0 0.0
        %418 = vmatpush1.xpose.msra.mxu0 %v377
        %419 = vmatprep.subr.mxu0 0.0
        %420 = vmatpush1.xpose.msra.mxu0 %v380
        %421 = vmatprep.subr.mxu0 0.0
        %422 = vmatpush1.xpose.msra.mxu0 %v383
        %423 = vmatprep.subr.mxu0 0.0
        %424 = vmatpush1.xpose.msra.mxu0 %v386
        %425 = vmatprep.subr.mxu0 0.0
        %426 = vmatpush1.xpose.msra.mxu0 %v389
        %427 = vmatprep.subr.mxu0 0.0
        %428 = vmatpush1.xpose.msra.mxu0 %v392
        %429 = vmatprep.subr.mxu0 0.0
        %430 = vmatpush1.xpose.msra.mxu0 %v395
        %431 = vmatprep.subr.mxu0 0.0
        %432 = vmatpush1.xpose.msra.mxu0 %v398
        %433 = vmatprep.subr.mxu0 0.0
        %434 = vmatpush1.xpose.msra.mxu0 %v401
        %435 = vmatprep.subr.mxu0 0.0
        %436 = vmatpush1.xpose.msra.mxu0 0.0
        %437 = vmatprep.subr.mxu0 0.0
        %438 = vmatpush1.xpose.msra.mxu0 0.0
        %439 = vmatprep.subr.mxu0 0.0
        %440 = vmatpush1.xpose.msra.mxu0 0.0
        %441 = vmatprep.subr.mxu0 0.0
        %442 = vmatpush1.xpose.msra.mxu0 0.0
        %443 = vmatprep.subr.mxu0 0.0
        %444 = vmatpush1.xpose.msra.mxu0 0.0
        %445 = vmatprep.subr.mxu0 0.0
        %446 = vmatpush1.xpose.msra.mxu0 0.0
        %447 = vmatprep.subr.mxu0 0.0
        %448 = vmatpush1.xpose.msra.mxu0 0.0
        %449 = vmatprep.subr.mxu0 0.0
        %450 = vmatpush1.xpose.msra.mxu0 0.0
        %451 = vmatprep.subr.mxu0 0.0
        %452 = vmatpush1.xpose.msra.mxu0 0.0
        %453 = vmatprep.subr.mxu0 0.0
        %454 = vmatpush1.xpose.msra.mxu0 0.0
        %455 = vmatprep.subr.mxu0 0.0
        %456 = vmatpush1.xpose.msra.mxu0 0.0
        %457 = vmatprep.subr.mxu0 0.0
        %458 = vmatpush1.xpose.msra.mxu0 0.0
        %459 = vmatprep.subr.mxu0 0.0
        %460 = vmatpush1.xpose.msra.mxu0 0.0
        %461 = vmatprep.subr.mxu0 0.0
        %462 = vmatpush1.xpose.msra.mxu0 0.0
        %463 = vmatprep.subr.mxu0 0.0
        %464 = vmatpush1.xpose.msra.mxu0 0.0
        %465 = vmatprep.subr.mxu0 0.0
        %466 = vmatpush1.xpose.msra.mxu0 0.0
        %467 = vmatprep.mubr.f32.mxu0 0.0
        %468 = vmatmul.mubr.f32.gmra.mrb[0].mxu0 %v353
        %v469 = vpop.f32.mrb[0].mxu0
        %v470 = vadd.f32 0.0, %v469
        %v471 = vpop.f32.mrb[0].mxu0
        %472 = vdwg.mxu0
        %v473 = vld [vmem:[#allocation2] sm:$0xff]
        %475 = vset.pattern.permute.xlu0 0
        %476 = vperm.xlu0 %475, %v473
        %v477 = vpop.permute.xlu0 %476
        %v479 = vmul.f32 %v470, %v477
        %480 = vst [vmem:[%s191] sm:$0xff] %v479
        %s481 = sand.u32 %s103, 1
        %s482 = scalar_lea.sflag [#allocation4], %s481
        %s483 = sand.u32 %s103, 1
        %s484 = smul.addr %s483, 8
        %s485 = scalar_lea.vmem [#allocation3], %s484
        // Predicated region
        $region33: #{tpu_custom_call.1} parent=27 // pred_check
          %p486 = pneg %p113
        $region34: #{tpu_custom_call.1} parent=27 // pred_check_branch
          %488 = sbr.rel (%p486) target = $region36
        $region35: #{tpu_custom_call.1} parent=27 // pred_region
          %s490 = ssub.s32 128, 128
          %491 = vsyncadd %s482, %s490
          %s492 = sadd.s32 %s23, %s22
          %s493 = sadd.s32 %s492, %s21
          %s494 = smul.addr %s493, 128
          %s495 = scalar_lea.hbm %s2, %s494
          %s497 = sshll.u32 %s485, 4
          %s498 = int_to_ptr.vmem [resolvable:$true] %s497
          %500 = dma.vmem_to_hbm [thread:$0]  %s498, 128, %s495, %s482
        $region36: #{tpu_custom_call.1} parent=27 // pred_fallthru
          _
      $region28: #{tpu_custom_call.1} parent=5 // pred_fallthru
        _
      %p501 = scmp.le.s32.totalorder 2, %s11
      // Predicated region
      $region37: #{tpu_custom_call.1} parent=5 // pred_check
        %p502 = pneg %p501
      $region38: #{tpu_custom_call.1} parent=5 // pred_check_branch
        %504 = sbr.rel (%p502) target = $region40
      $region39: #{tpu_custom_call.1} parent=5 // pred_region
        %s505 = ssub.s32 %s11, 2
        // Predicated region
        $region41: #{tpu_custom_call.1} parent=39 // pred_check
          %p506 = pneg %p119
        $region42: #{tpu_custom_call.1} parent=39 // pred_check_branch
          %508 = sbr.rel (%p506) target = $region44
        $region43: #{tpu_custom_call.1} parent=39 // pred_region
          %s509 = sand.u32 %s104, 1
          %s510 = scalar_lea.sflag [#allocation4], %s509
          %s511 = sand.u32 %s104, 1
          %s512 = smul.addr %s511, 8
          %s513 = scalar_lea.vmem [#allocation3], %s512
          %514 = dma.done %s510, 128
        $region44: #{tpu_custom_call.1} parent=39 // pred_fallthru
          _
      $region40: #{tpu_custom_call.1} parent=5 // pred_fallthru
        _
    $region6: #{tpu_custom_call.1} parent=1 // loop_footer
      %s15 = sadd.s32 1, %s11
    $region7: #{tpu_custom_call.1} parent=1 // loop_footer_branch
      %10 = sbr.rel target = $region3
    $region8: #{tpu_custom_call.1} parent=1 // loop_exit
      _
    %515 = vsyncpa [#allocation4], 1
    %s516 = scalar_lea.sflag [#allocation4], 1
    %517 = vsyncpa %s516, 1

</llo_original>
